<compile_context>
chip_gen: v7x
topology: tpu7x:2x2x1
jax: 0.10.0
libtpu: 0.0.40
codegen_flags: <defaults>
</compile_context>

<pallas_src>
import jax
import jax.numpy as jnp
from jax import lax
from jax.experimental import pallas as pl
from jax.experimental.pallas import tpu as pltpu


def _dma_copy_kernel(table_hbm, out_hbm, sem):
    """Copy the first `seq_len` rows of the table straight HBM -> HBM with one DMA."""
    seq_len = out_hbm.shape[0]
    cp = pltpu.make_async_copy(table_hbm.at[pl.ds(0, seq_len), :], out_hbm, sem)
    cp.start()
    cp.wait()


def positional_embedding(x: jax.Array, table: jax.Array) -> jax.Array:
    """Pallas equivalent of PositionalEmbedding.forward(x).

    x     : (bs, seq_len) integer tokens (only the shape is used, as in PyTorch)
    table : (context_length, emb_dim) embedding weights
    returns (seq_len, emb_dim) = table[:seq_len]
    """
    bs, seq_len = x.shape
    ctx, emb = table.shape
    assert seq_len <= ctx, "seq_len must not exceed context_length"

    # Trivial case: full-length lookup is the whole table — zero bytes moved.
    if seq_len == ctx:
        return table

    # Ragged row count: a single XLA slice-copy already moves the minimal
    # seq_len*emb bytes once (read + write).  This replaces the old
    # lax.slice-then-kernel double copy on this path.
    if seq_len % 8 != 0:
        return lax.slice(table, (0, 0), (seq_len, emb))

    # Main path: one HBM->HBM DMA.  No grid, no VMEM staging, no per-step cost.
    return pl.pallas_call(
        _dma_copy_kernel,
        out_shape=jax.ShapeDtypeStruct((seq_len, emb), table.dtype),
        in_specs=[pl.BlockSpec(memory_space=pl.ANY)],
        out_specs=pl.BlockSpec(memory_space=pl.ANY),
        scratch_shapes=[pltpu.SemaphoreType.DMA],
        compiler_params=pltpu.CompilerParams(has_side_effects=True),
    )(table)


if __name__ == "__main__":
    # Module config (small, consistent with the forward pass).
    context_length = 16
    emb_dim = 128        # lane-aligned embedding dim
    bs, seq_len = 2, 8

    key = jax.random.PRNGKey(0)
    k_tab, k_x = jax.random.split(key)

    # Deterministic "nn.Embedding" weight init (synthetic N(0,1), like PyTorch default).
    table = jax.random.normal(k_tab, (context_length, emb_dim), dtype=jnp.float32)

    # Token ids — values are irrelevant to the forward, only the shape matters.
    x = jax.random.randint(k_x, (bs, seq_len), 0, context_length, dtype=jnp.int32)

    # Main (Pallas DMA) path: seq_len = 8, aligned, < context_length.
    out = positional_embedding(x, table)
    out = jax.block_until_ready(out)
    ref = table[:seq_len]
    assert out.shape == (seq_len, emb_dim), out.shape
    assert out.dtype == jnp.float32, out.dtype
    assert jnp.allclose(out, ref), "mismatch vs reference slice (kernel path)"

    # Full-length path (alias, no copy).
    x_full = jnp.zeros((bs, context_length), dtype=jnp.int32)
    out_full = jax.block_until_ready(positional_embedding(x_full, table))
    assert jnp.allclose(out_full, table), "mismatch vs reference (full-length path)"

    # Ragged path (single XLA slice-copy).
    x_ragged = jnp.zeros((bs, 5), dtype=jnp.int32)
    out_ragged = jax.block_until_ready(positional_embedding(x_ragged, table))
    assert out_ragged.shape == (5, emb_dim)
    assert jnp.allclose(out_ragged, table[:5]), "mismatch vs reference (ragged path)"

    print("KERNEL_OK")
</pallas_src>

<mosaic_0001>
module attributes {stable_mosaic.version = 11 : i64} {
  func.func @_dma_copy_kernel(%arg0: memref<16x128xf32, #tpu.memory_space<any>>, %arg1: memref<8x128xf32, #tpu.memory_space<any>>, %arg2: memref<!tpu.dma_semaphore, #tpu.memory_space<semaphore_mem>>) attributes {dimension_semantics = [], scalar_prefetch = 0 : i64, scratch_operands = 1 : i64, tpu.core_type = #tpu.core_type<tc>} {
    %c0_i32 = arith.constant 0 : i32
    %c0_i32_0 = arith.constant 0 : i32
    %0 = tpu.memref_slice %arg0[%c0_i32, %c0_i32_0] : memref<16x128xf32, #tpu.memory_space<any>> -> memref<8x128xf32, #tpu.memory_space<any>>
    tpu.enqueue_dma source(%0 : memref<8x128xf32, #tpu.memory_space<any>>) target(%arg1 : memref<8x128xf32, #tpu.memory_space<any>>) target_semaphore(%arg2 : memref<!tpu.dma_semaphore, #tpu.memory_space<semaphore_mem>>)
    %c0_i32_1 = arith.constant 0 : i32
    %c0_i32_2 = arith.constant 0 : i32
    %1 = tpu.memref_slice %arg0[%c0_i32_1, %c0_i32_2] : memref<16x128xf32, #tpu.memory_space<any>> -> memref<8x128xf32, #tpu.memory_space<any>>
    tpu.wait_dma2 semaphore(%arg2 : memref<!tpu.dma_semaphore, #tpu.memory_space<semaphore_mem>>) src(%1 : memref<8x128xf32, #tpu.memory_space<any>>) dst(%arg1 : memref<8x128xf32, #tpu.memory_space<any>>)
    return
  }
}

</mosaic_0001>

<llo_original>
// kernel: tpu_custom_call.1
$region0: #{tpu_custom_call.1}
  #allocation0 [shape = 'u32[]', space=smem, size = 0x4, offset = 0x4, fixed_abs, tag = 'smem constant byte address 0x4 - core index']
  #allocation1 [shape = 'u32[144,128]{1,0:T(1,128)}', space=vmem, size = 0x12000, scoped, tag = 'internal scratch']
  #allocation2 [shape = 's32[1]{0}', space=sflag, size = 0x4, scoped, tag = 'scratch operand']
  #allocation3 [shape = 's32[]', space=sflag, size = 0x4, offset = 0, fixed_abs, tag = 'sflag constant byte address 0x0 - dummy sync flag']
  #allocation4 [shape = 'u32[0]{0}', space=smem, size = 0, offset = 0, fixed_abs, tag = 'smem constant byte address 0x0 - null']
  %s0 = inlined_call_operand.hbm [shape: f32[16,128], index: 0, kind: input, shape index: {}]
  %s1 = inlined_call_operand.hbm [shape: f32[8,128], index: 1, kind: output, shape index: {}]
  %s2 = sld [smem:[#allocation0]]
  $region2: #{tpu_custom_call.1} parent=0
    _
  %s4 = ssub.s32 1, %s2
  %s5 = scalar_select 0, %s4, %s2
  %s7 = sshll.u32 1, 14
  %s8 = sxor.u32 4294967295, %s7
  %s11 = sshll.u32 3, 24
  %s12 = sxor.u32 4294967295, %s11
  %s13 = sand.u32 0, %s12
  %s15 = sor.u32 %s13, 0
  %18 = dma.general %s0, 128, %s1, [#allocation2], [#allocation3], [#allocation4], %s15, 0
  %s19 = smul.u32 8, 1
  %s20 = sshll.u32 %s19, 4
  %21 = dma.done [#allocation2], %s20
  %22 = vsyncmov [#allocation2]
  %s23 = vpop.sfrf %22
  %p24 = scmp.eq.s32.totalorder %s23, 0
  %p25 = pneg %p24
  %27 = shalt.err (%p25)

</llo_original>
